<compile_context>
chip_gen: v5e
topology: v5e:2x2
jax: 0.10.0
libtpu: 0.0.40
codegen_flags: <defaults>
</compile_context>

<pallas_src>
import functools

import jax
import jax.numpy as jnp
from jax.experimental import pallas as pl
from jax.experimental.pallas import tpu as pltpu


def _lse_kernel(tail_len, exp_dtype,
                s_ref, e_ref, out_ref,
                ms_ref, ls_ref, me_ref, le_ref):
    """Online logsumexp over the sequence axis for start & end logits.

    s_ref/e_ref: (row_tile, seq_tile) logits (any float dtype)
    out_ref:     (row_tile, 2) f32 [logsumexp_start, logsumexp_end]
    scratch:     running max / running sum-exp per row (f32 VMEM), x2 streams.
    tail_len:    static; S % seq_tile (0 means no partial last tile).
    exp_dtype:   dtype used for the big exp (f32, or bf16 on v6e/v7x inputs).
    """
    si = pl.program_id(1)
    n_seq = pl.num_programs(1)

    @pl.when(si == 0)
    def _init():
        for m_ref, l_ref in ((ms_ref, ls_ref), (me_ref, le_ref)):
            m_ref[...] = jnp.full_like(m_ref, -jnp.inf)
            l_ref[...] = jnp.zeros_like(l_ref)

    def update(x_ref, m_ref, l_ref, mask_tail):
        x = x_ref[...].astype(jnp.float32)
        if mask_tail:
            # Only traced for the tail path: OOB lanes of the last sequence
            # tile hold undefined VMEM data and must be masked to -inf BEFORE
            # the max / exp.  (1, cols) iota broadcasts across rows.
            cols = x_ref.shape[1]
            col = jax.lax.broadcasted_iota(jnp.int32, (1, cols), 1)
            x = jnp.where(col < tail_len, x, -jnp.inf)
        m_prev = m_ref[...]
        m_new = jnp.maximum(m_prev, jnp.max(x, axis=1, keepdims=True))
        # Big exp in exp_dtype (bf16 on v6e/v7x bf16 inputs halves EUP pushes);
        # accumulation stays f32.  exp(-inf) -> 0 so masked lanes vanish.
        e = jnp.exp((x - m_new).astype(exp_dtype))
        l_ref[...] = (l_ref[...] * jnp.exp(m_prev - m_new)
                      + jnp.sum(e.astype(jnp.float32), axis=1, keepdims=True))
        m_ref[...] = m_new

    if tail_len > 0:
        # Tail mask gated to the last sequence tile only; interior tiles pay
        # no cmp/select.
        @pl.when(si < n_seq - 1)
        def _interior():
            update(s_ref, ms_ref, ls_ref, False)
            update(e_ref, me_ref, le_ref, False)

        @pl.when(si == n_seq - 1)
        def _tail():
            update(s_ref, ms_ref, ls_ref, True)
            update(e_ref, me_ref, le_ref, True)
    else:
        update(s_ref, ms_ref, ls_ref, False)
        update(e_ref, me_ref, le_ref, False)

    @pl.when(si == n_seq - 1)
    def _finalize():
        # TODO(synk): a row whose logits are all -inf gives NaN here
        # (-inf + log 0); impossible for finite inputs, not guarded.
        lse_s = ms_ref[...] + jnp.log(ls_ref[...])
        lse_e = me_ref[...] + jnp.log(le_ref[...])
        out_ref[...] = jnp.concatenate([lse_s, lse_e], axis=1)


def _pick_row_tile(batch):
    # Cap the row tile at batch // 2 for batch >= 16 so the "parallel" row
    # grid has >= 2 steps: dimension_semantics shards it across the 2
    # TensorCores on v7x (no effect on v5e / v6e, which have 1 TC).
    cap = batch // 2 if batch >= 16 else batch
    for cand in (256, 128, 64, 32, 16, 8):
        if cand <= cap and batch % cand == 0:
            return cand
    return batch  # small / odd batch: take every row at once (full-dim block)


def _pick_seq_tile(seq_len, row_tile, itemsize, budget_bytes=16 << 20):
    # Full sequence in one tile when it is small; otherwise stream 4096-lane
    # tiles (multiple of 128) and mask only the tail tile in-kernel.
    st = seq_len if seq_len <= 4096 else 4096
    # Keep the double-buffered input footprint (2 inputs x 2 pipeline buffers)
    # within budget (~16 MiB): safe for v5e's 16 MiB default scoped VMEM once
    # we raise the limit explicitly, and well under v7x's 64 MiB physical.
    while st > 256 and st % 256 == 0 and 4 * row_tile * st * itemsize > budget_bytes:
        st //= 2
    return st


def _pick_exp_dtype(logits_dtype):
    # bf16 exp only when the logits already arrive as bf16 AND the chip has a
    # bf16 EUP/VPU (v6e and later).  v5e (and older) keep f32 exp.
    if logits_dtype != jnp.bfloat16:
        return jnp.float32
    try:
        kind = jax.devices()[0].device_kind.lower()
    except Exception:  # pragma: no cover - defensive
        return jnp.float32
    if any(tag in kind for tag in ("v6", "v7", "7x")):
        return jnp.bfloat16
    return jnp.float32


def base_loss(start_logits, end_logits, start_positions, end_positions,
              *, row_tile=None, seq_tile=None, exp_dtype=None):
    """start/end logits: (B, S, 1) float; positions: (B,) int. Returns scalar f32."""
    B, S = start_logits.shape[0], start_logits.shape[1]
    # Logits keep their HBM dtype (bf16 stays bf16); f32 cast happens on the
    # VMEM tile inside the kernel.
    s2d = start_logits.reshape(B, S)
    e2d = end_logits.reshape(B, S)
    sp = start_positions.astype(jnp.int32).reshape(B, 1)
    ep = end_positions.astype(jnp.int32).reshape(B, 1)

    itemsize = jnp.dtype(s2d.dtype).itemsize
    bt = row_tile if row_tile is not None else _pick_row_tile(B)
    st = seq_tile if seq_tile is not None else _pick_seq_tile(S, bt, itemsize)
    if exp_dtype is None:
        exp_dtype = _pick_exp_dtype(s2d.dtype)
    assert B % bt == 0 and (bt == B or bt % 8 == 0), (B, bt)
    assert st == S or st % 128 == 0, (S, st)

    grid = (B // bt, pl.cdiv(S, st))
    tail_len = S % st  # static; 0 means the last tile is full
    kernel = functools.partial(_lse_kernel, tail_len, exp_dtype)

    # Explicit VMEM limit sized from the double-buffered input footprint, with
    # headroom (v5e default scoped limit is only 16 MiB; stay <= 30 MiB so it
    # also fits comfortably inside v7x's 64 MiB physical VMEM).
    footprint = 2 * 2 * bt * st * itemsize
    vmem_limit = int(min(max(footprint + (4 << 20), 16 << 20), 30 << 20))

    lse = pl.pallas_call(
        kernel,
        out_shape=jax.ShapeDtypeStruct((B, 2), jnp.float32),
        grid_spec=pltpu.PrefetchScalarGridSpec(
            num_scalar_prefetch=0,
            grid=grid,
            in_specs=[
                pl.BlockSpec((bt, st), lambda r, s: (r, s)),  # start logits
                pl.BlockSpec((bt, st), lambda r, s: (r, s)),  # end logits
            ],
            out_specs=pl.BlockSpec((bt, 2), lambda r, s: (r, 0)),
            scratch_shapes=[pltpu.VMEM((bt, 1), jnp.float32)] * 4,
        ),
        compiler_params=pltpu.CompilerParams(
            dimension_semantics=("parallel", "arbitrary"),
            vmem_limit_bytes=vmem_limit),
    )(s2d, e2d)

    # Gold-logit extraction hoisted out of the hot loop: a tiny B-element
    # gather.  (If xprof ever shows XLA lowering this as a one-hot matmul for
    # huge S, reinstate the in-kernel compare/select path.)
    gold_s = jnp.take_along_axis(s2d, sp, axis=1).astype(jnp.float32)
    gold_e = jnp.take_along_axis(e2d, ep, axis=1).astype(jnp.float32)
    nll = (lse[:, 0:1] - gold_s) + (lse[:, 1:2] - gold_e)
    return jnp.sum(nll) / (2.0 * B)


def _reference(start_logits, end_logits, start_positions, end_positions):
    B = start_logits.shape[0]
    ls = jax.nn.log_softmax(start_logits[..., 0].astype(jnp.float32), axis=1)
    le = jax.nn.log_softmax(end_logits[..., 0].astype(jnp.float32), axis=1)
    idx = jnp.arange(B)
    return -(jnp.sum(ls[idx, start_positions] + le[idx, end_positions])) / (2.0 * B)


if __name__ == "__main__":
    def _run_case(key, B, S, dtype=jnp.float32, atol=1e-5, rtol=1e-4, **kw):
        k1, k2, k3, k4 = jax.random.split(key, 4)
        sl = jax.random.normal(k1, (B, S, 1), dtype=jnp.float32).astype(dtype)
        el = jax.random.normal(k2, (B, S, 1), dtype=jnp.float32).astype(dtype)
        sp = jax.random.randint(k3, (B,), 0, S, dtype=jnp.int32)
        ep = jax.random.randint(k4, (B,), 0, S, dtype=jnp.int32)
        loss = base_loss(sl, el, sp, ep, **kw)
        jax.block_until_ready(loss)
        ref = _reference(sl, el, sp, ep)
        assert jnp.allclose(loss, ref, atol=atol, rtol=rtol), (B, S, loss, ref)

    root = jax.random.PRNGKey(0)
    keys = jax.random.split(root, 5)

    # Module's nominal small shape: single (2, 8) tile.
    _run_case(keys[0], B=2, S=8)
    # Streaming-LSE path: row grid (parallel) x sequence grid (arbitrary).
    _run_case(keys[1], B=16, S=384, row_tile=8, seq_tile=128)
    # Tail-masked last sequence tile (S not a multiple of the tile).
    _run_case(keys[2], B=4, S=300, seq_tile=128)
    # Auto tiles: row tile capped at B//2 -> 2-step parallel row grid.
    _run_case(keys[3], B=16, S=512)
    # bf16 logits pass through HBM in bf16; exp may run in bf16 on v6e/v7x.
    _run_case(keys[4], B=8, S=256, dtype=jnp.bfloat16, atol=2e-2, rtol=2e-2)

    print("KERNEL_OK")
</pallas_src>

<mosaic_0001>
module attributes {stable_mosaic.version = 11 : i64} {
  func.func @_lse_kernel(%arg0: i32, %arg1: i32, %arg2: memref<2x8xf32, #tpu.memory_space<vmem>>, %arg3: memref<2x8xf32, #tpu.memory_space<vmem>>, %arg4: memref<2x2xf32, #tpu.memory_space<vmem>>, %arg5: memref<2x1xf32, #tpu.memory_space<vmem>>, %arg6: memref<2x1xf32, #tpu.memory_space<vmem>>, %arg7: memref<2x1xf32, #tpu.memory_space<vmem>>, %arg8: memref<2x1xf32, #tpu.memory_space<vmem>>) attributes {dimension_semantics = [#tpu.dimension_semantics<parallel>, #tpu.dimension_semantics<arbitrary>], iteration_bounds = array<i64: 1, 1>, scalar_prefetch = 0 : i64, scratch_operands = 4 : i64, tpu.core_type = #tpu.core_type<tc>, window_params = [{transform_indices = @transform_0, window_bounds = array<i64: 2, 8>}, {transform_indices = @transform_1, window_bounds = array<i64: 2, 8>}, {transform_indices = @transform_2, window_bounds = array<i64: 2, 2>}]} {
    %c0_i32 = arith.constant 0 : i32
    %0 = arith.cmpi eq, %arg1, %c0_i32 : i32
    %1 = arith.extui %0 : i1 to i32
    %c0_i32_0 = arith.constant 0 : i32
    %2 = arith.cmpi ne, %1, %c0_i32_0 : i32
    scf.if %2 {
      %cst_25 = arith.constant 0xFF800000 : f32
      %40 = vector.broadcast %cst_25 : f32 to vector<2x1xf32>
      %c0_26 = arith.constant 0 : index
      %c0_27 = arith.constant 0 : index
      %41 = vector.load %arg5[%c0_26, %c0_27] : memref<2x1xf32, #tpu.memory_space<vmem>>, vector<2x1xf32>
      tpu.vector_store %arg5[%c0_26, %c0_27], %40 {strides = array<i32>} : memref<2x1xf32, #tpu.memory_space<vmem>>, vector<2x1xf32>,
      %cst_28 = arith.constant 0.000000e+00 : f32
      %42 = vector.broadcast %cst_28 : f32 to vector<2x1xf32>
      %c0_29 = arith.constant 0 : index
      %c0_30 = arith.constant 0 : index
      %43 = vector.load %arg6[%c0_29, %c0_30] : memref<2x1xf32, #tpu.memory_space<vmem>>, vector<2x1xf32>
      tpu.vector_store %arg6[%c0_29, %c0_30], %42 {strides = array<i32>} : memref<2x1xf32, #tpu.memory_space<vmem>>, vector<2x1xf32>,
      %cst_31 = arith.constant 0xFF800000 : f32
      %44 = vector.broadcast %cst_31 : f32 to vector<2x1xf32>
      %c0_32 = arith.constant 0 : index
      %c0_33 = arith.constant 0 : index
      %45 = vector.load %arg7[%c0_32, %c0_33] : memref<2x1xf32, #tpu.memory_space<vmem>>, vector<2x1xf32>
      tpu.vector_store %arg7[%c0_32, %c0_33], %44 {strides = array<i32>} : memref<2x1xf32, #tpu.memory_space<vmem>>, vector<2x1xf32>,
      %cst_34 = arith.constant 0.000000e+00 : f32
      %46 = vector.broadcast %cst_34 : f32 to vector<2x1xf32>
      %c0_35 = arith.constant 0 : index
      %c0_36 = arith.constant 0 : index
      %47 = vector.load %arg8[%c0_35, %c0_36] : memref<2x1xf32, #tpu.memory_space<vmem>>, vector<2x1xf32>
      tpu.vector_store %arg8[%c0_35, %c0_36], %46 {strides = array<i32>} : memref<2x1xf32, #tpu.memory_space<vmem>>, vector<2x1xf32>,
    } else {
    }
    %c0 = arith.constant 0 : index
    %c0_1 = arith.constant 0 : index
    %3 = vector.load %arg2[%c0, %c0_1] : memref<2x8xf32, #tpu.memory_space<vmem>>, vector<2x8xf32>
    %c0_2 = arith.constant 0 : index
    %c0_3 = arith.constant 0 : index
    %4 = vector.load %arg5[%c0_2, %c0_3] : memref<2x1xf32, #tpu.memory_space<vmem>>, vector<2x1xf32>
    %cst = arith.constant dense<0xFF800000> : vector<2xf32>
    %5 = vector.multi_reduction <maximumf>, %3, %cst [1] : vector<2x8xf32> to vector<2xf32>
    %6 = vector.shape_cast %5 : vector<2xf32> to vector<2x1xf32>
    %7 = arith.maximumf %4, %6 : vector<2x1xf32>
    %8 = vector.broadcast %7 : vector<2x1xf32> to vector<2x8xf32>
    %9 = arith.subf %3, %8 : vector<2x8xf32>
    %10 = math.exp %9 : vector<2x8xf32>
    %c0_4 = arith.constant 0 : index
    %c0_5 = arith.constant 0 : index
    %11 = vector.load %arg6[%c0_4, %c0_5] : memref<2x1xf32, #tpu.memory_space<vmem>>, vector<2x1xf32>
    %12 = arith.subf %4, %7 : vector<2x1xf32>
    %13 = math.exp %12 : vector<2x1xf32>
    %14 = arith.mulf %11, %13 : vector<2x1xf32>
    %cst_6 = arith.constant dense<0.000000e+00> : vector<2xf32>
    %15 = vector.multi_reduction <add>, %10, %cst_6 [1] : vector<2x8xf32> to vector<2xf32>
    %16 = vector.shape_cast %15 : vector<2xf32> to vector<2x1xf32>
    %17 = arith.addf %14, %16 : vector<2x1xf32>
    %c0_7 = arith.constant 0 : index
    %c0_8 = arith.constant 0 : index
    %18 = vector.load %arg6[%c0_7, %c0_8] : memref<2x1xf32, #tpu.memory_space<vmem>>, vector<2x1xf32>
    tpu.vector_store %arg6[%c0_7, %c0_8], %17 {strides = array<i32>} : memref<2x1xf32, #tpu.memory_space<vmem>>, vector<2x1xf32>,
    %c0_9 = arith.constant 0 : index
    %c0_10 = arith.constant 0 : index
    %19 = vector.load %arg5[%c0_9, %c0_10] : memref<2x1xf32, #tpu.memory_space<vmem>>, vector<2x1xf32>
    tpu.vector_store %arg5[%c0_9, %c0_10], %7 {strides = array<i32>} : memref<2x1xf32, #tpu.memory_space<vmem>>, vector<2x1xf32>,
    %c0_11 = arith.constant 0 : index
    %c0_12 = arith.constant 0 : index
    %20 = vector.load %arg3[%c0_11, %c0_12] : memref<2x8xf32, #tpu.memory_space<vmem>>, vector<2x8xf32>
    %c0_13 = arith.constant 0 : index
    %c0_14 = arith.constant 0 : index
    %21 = vector.load %arg7[%c0_13, %c0_14] : memref<2x1xf32, #tpu.memory_space<vmem>>, vector<2x1xf32>
    %cst_15 = arith.constant dense<0xFF800000> : vector<2xf32>
    %22 = vector.multi_reduction <maximumf>, %20, %cst_15 [1] : vector<2x8xf32> to vector<2xf32>
    %23 = vector.shape_cast %22 : vector<2xf32> to vector<2x1xf32>
    %24 = arith.maximumf %21, %23 : vector<2x1xf32>
    %25 = vector.broadcast %24 : vector<2x1xf32> to vector<2x8xf32>
    %26 = arith.subf %20, %25 : vector<2x8xf32>
    %27 = math.exp %26 : vector<2x8xf32>
    %c0_16 = arith.constant 0 : index
    %c0_17 = arith.constant 0 : index
    %28 = vector.load %arg8[%c0_16, %c0_17] : memref<2x1xf32, #tpu.memory_space<vmem>>, vector<2x1xf32>
    %29 = arith.subf %21, %24 : vector<2x1xf32>
    %30 = math.exp %29 : vector<2x1xf32>
    %31 = arith.mulf %28, %30 : vector<2x1xf32>
    %cst_18 = arith.constant dense<0.000000e+00> : vector<2xf32>
    %32 = vector.multi_reduction <add>, %27, %cst_18 [1] : vector<2x8xf32> to vector<2xf32>
    %33 = vector.shape_cast %32 : vector<2xf32> to vector<2x1xf32>
    %34 = arith.addf %31, %33 : vector<2x1xf32>
    %c0_19 = arith.constant 0 : index
    %c0_20 = arith.constant 0 : index
    %35 = vector.load %arg8[%c0_19, %c0_20] : memref<2x1xf32, #tpu.memory_space<vmem>>, vector<2x1xf32>
    tpu.vector_store %arg8[%c0_19, %c0_20], %34 {strides = array<i32>} : memref<2x1xf32, #tpu.memory_space<vmem>>, vector<2x1xf32>,
    %c0_21 = arith.constant 0 : index
    %c0_22 = arith.constant 0 : index
    %36 = vector.load %arg7[%c0_21, %c0_22] : memref<2x1xf32, #tpu.memory_space<vmem>>, vector<2x1xf32>
    tpu.vector_store %arg7[%c0_21, %c0_22], %24 {strides = array<i32>} : memref<2x1xf32, #tpu.memory_space<vmem>>, vector<2x1xf32>,
    %c0_i32_23 = arith.constant 0 : i32
    %37 = arith.cmpi eq, %arg1, %c0_i32_23 : i32
    %38 = arith.extui %37 : i1 to i32
    %c0_i32_24 = arith.constant 0 : i32
    %39 = arith.cmpi ne, %38, %c0_i32_24 : i32
    scf.if %39 {
      %c0_25 = arith.constant 0 : index
      %c0_26 = arith.constant 0 : index
      %40 = vector.load %arg5[%c0_25, %c0_26] : memref<2x1xf32, #tpu.memory_space<vmem>>, vector<2x1xf32>
      %c0_27 = arith.constant 0 : index
      %c0_28 = arith.constant 0 : index
      %41 = vector.load %arg6[%c0_27, %c0_28] : memref<2x1xf32, #tpu.memory_space<vmem>>, vector<2x1xf32>
      %42 = math.log %41 : vector<2x1xf32>
      %43 = arith.addf %40, %42 : vector<2x1xf32>
      %c0_29 = arith.constant 0 : index
      %c0_30 = arith.constant 0 : index
      %44 = vector.load %arg7[%c0_29, %c0_30] : memref<2x1xf32, #tpu.memory_space<vmem>>, vector<2x1xf32>
      %c0_31 = arith.constant 0 : index
      %c0_32 = arith.constant 0 : index
      %45 = vector.load %arg8[%c0_31, %c0_32] : memref<2x1xf32, #tpu.memory_space<vmem>>, vector<2x1xf32>
      %46 = math.log %45 : vector<2x1xf32>
      %47 = arith.addf %44, %46 : vector<2x1xf32>
      %48 = tpu.concatenate %43, %47 in 1 : vector<2x1xf32>, vector<2x1xf32> -> vector<2x2xf32>
      %c0_33 = arith.constant 0 : index
      %c0_34 = arith.constant 0 : index
      %49 = vector.load %arg4[%c0_33, %c0_34] : memref<2x2xf32, #tpu.memory_space<vmem>>, vector<2x2xf32>
      tpu.vector_store %arg4[%c0_33, %c0_34], %48 {strides = array<i32>} : memref<2x2xf32, #tpu.memory_space<vmem>>, vector<2x2xf32>,
    } else {
    }
    return
  }
  func.func @transform_0(%arg0: i32, %arg1: i32) -> (i32, i32) {
    %c0_i32 = arith.constant 0 : i32
    return %arg0, %arg1 : i32, i32
  }
  func.func @transform_1(%arg0: i32, %arg1: i32) -> (i32, i32) {
    %c0_i32 = arith.constant 0 : i32
    return %arg0, %arg1 : i32, i32
  }
  func.func @transform_2(%arg0: i32, %arg1: i32) -> (i32, i32) {
    %c0_i32 = arith.constant 0 : i32
    %c0_i32_0 = arith.constant 0 : i32
    return %arg0, %c0_i32 : i32, i32
  }
}

</mosaic_0001>

<llo_original>
// kernel: tpu_custom_call.1
$region0: #{tpu_custom_call.1}
  #allocation0 [shape = 'u32[]', space=smem, size = 0x4, offset = 0x4, fixed_abs, tag = 'smem constant byte address 0x4 - core index']
  #allocation1 [shape = 'u32[72,128]{1,0:T(1,128)}', space=vmem, size = 0x9000, scoped, tag = 'internal scratch']
  #allocation2 [shape = 'f32[2,1]{1,0:T(2,128)}', space=vmem, size = 0x400, scoped, tag = 'scratch operand']
  #allocation3 [shape = 'f32[2,1]{1,0:T(2,128)}', space=vmem, size = 0x400, scoped, tag = 'scratch operand']
  #allocation4 [shape = 'f32[2,1]{1,0:T(2,128)}', space=vmem, size = 0x400, scoped, tag = 'scratch operand']
  #allocation5 [shape = 'f32[2,1]{1,0:T(2,128)}', space=vmem, size = 0x400, scoped, tag = 'scratch operand']
  %s0 = inlined_call_operand.hbm [shape: f32[2,8], index: 0, kind: input, shape index: {}]
  %s1 = inlined_call_operand.hbm [shape: f32[2,8], index: 1, kind: input, shape index: {}]
  %s2 = inlined_call_operand.hbm [shape: f32[2,2], index: 2, kind: output, shape index: {}]
  %s3 = sld [smem:[#allocation0]]
  $region34: #{tpu_custom_call.1} parent=0
    _
  %s5 = ssub.s32 1, %s3
  %s6 = scalar_select 0, %s5, %s3
  $region1: #{tpu_custom_call.1} parent=0
    #allocation6 [shape = 'u8[1024]{0}', space=vmem, size = 0x400, scoped, tag = 'input window, operand 0, single buffered']
    #allocation7 [shape = 's32[1]{0}', space=sflag, size = 0x4, scoped, tag = 'scoped memory for tpu_custom_call.1']
    #allocation8 [shape = 's32[1]{0}', space=sflag, size = 0x4, scoped, tag = 'scoped memory for tpu_custom_call.1']
    #allocation9 [shape = 'u8[1024]{0}', space=vmem, size = 0x400, scoped, tag = 'input window, operand 1, single buffered']
    #allocation10 [shape = 's32[1]{0}', space=sflag, size = 0x4, scoped, tag = 'scoped memory for tpu_custom_call.1']
    #allocation11 [shape = 'u8[1024]{0}', space=vmem, size = 0x400, scoped, tag = 'output window, operand 0, single buffered']
    %7 = vsyncpa [#allocation7], 0
    %8 = vsyncpa [#allocation10], 0
    %9 = vsyncpa [#allocation8], 0
    // Predicated region
    $region2: #{tpu_custom_call.1} parent=1 // pred_check
      _
    $region3: #{tpu_custom_call.1} parent=1 // pred_check_branch
      %11 = sbr.rel (0) target = $region5
    $region4: #{tpu_custom_call.1} parent=1 // pred_region
      %13 = vsyncadd [#allocation7], 0
      %s15 = sshll.u32 %s0, 4
      %s16 = int_to_ptr.hbm [resolvable:$true] %s15
      %s17 = sshll.u32 [#allocation6], 4
      %s18 = int_to_ptr.vmem [resolvable:$true] %s17
      %20 = dma.hbm_to_vmem [thread:$0]  %s16, 32, %s18, [#allocation7]
    $region5: #{tpu_custom_call.1} parent=1 // pred_fallthru
      _
    // Predicated region
    $region6: #{tpu_custom_call.1} parent=1 // pred_check
      _
    $region7: #{tpu_custom_call.1} parent=1 // pred_check_branch
      %22 = sbr.rel (0) target = $region9
    $region8: #{tpu_custom_call.1} parent=1 // pred_region
      %24 = vsyncadd [#allocation10], 0
      %s26 = sshll.u32 %s1, 4
      %s27 = int_to_ptr.hbm [resolvable:$true] %s26
      %s28 = sshll.u32 [#allocation9], 4
      %s29 = int_to_ptr.vmem [resolvable:$true] %s28
      %31 = dma.hbm_to_vmem [thread:$0]  %s27, 32, %s29, [#allocation10]
    $region9: #{tpu_custom_call.1} parent=1 // pred_fallthru
      _
    // Predicated region
    $region10: #{tpu_custom_call.1} parent=1 // pred_check
      _
    $region11: #{tpu_custom_call.1} parent=1 // pred_check_branch
      %33 = sbr.rel (0) target = $region13
    $region12: #{tpu_custom_call.1} parent=1 // pred_region
      %35 = dma.done [#allocation7], 32
    $region13: #{tpu_custom_call.1} parent=1 // pred_fallthru
      _
    // Predicated region
    $region14: #{tpu_custom_call.1} parent=1 // pred_check
      _
    $region15: #{tpu_custom_call.1} parent=1 // pred_check_branch
      %37 = sbr.rel (0) target = $region17
    $region16: #{tpu_custom_call.1} parent=1 // pred_region
      %39 = dma.done [#allocation10], 32
    $region17: #{tpu_custom_call.1} parent=1 // pred_fallthru
      _
    %p40 = scmp.eq.s32.totalorder 0, 0
    // Predicated region
    $region18: #{tpu_custom_call.1} parent=1 // pred_check
      %p41 = pneg %p40
    $region19: #{tpu_custom_call.1} parent=1 // pred_check_branch
      %43 = sbr.rel (%p41) target = $region21
    $region20: #{tpu_custom_call.1} parent=1 // pred_region
      %vm44 = vcmask 1024
      %45 = vst.msk [vmem:[#allocation2] sm:$0x3] %vm44, -inf
      %46 = vst.msk [vmem:[#allocation3] sm:$0x3] %vm44, 0.0
      %47 = vst.msk [vmem:[#allocation4] sm:$0x3] %vm44, -inf
      %48 = vst.msk [vmem:[#allocation5] sm:$0x3] %vm44, 0.0
    $region21: #{tpu_custom_call.1} parent=1 // pred_fallthru
      _
    %v49 = vld [vmem:[#allocation6] sm:$0x3]
    %v50 = vld [vmem:[#allocation2] sm:$0x3]
    %vm51 = vcmask 58368
    %v52 = vsel %vm51, %v49, -inf
    %53 = vmax.xlane.f32.xlu0 %v52
    %v54 = vpop.xlane.xlu0 %53
    %v55 = vmax.f32 %v50, %v54
    %57 = vset.pattern.permute.xlu0 0
    %58 = vperm.xlu0 %57, %v55
    %v59 = vpop.permute.xlu0 %58
    %v61 = vsub.f32 %v49, %v59
    %v62 = vmul.f32 %v61, 1.442695
    %v63 = vpow.pop %v62
    %v64 = vld [vmem:[#allocation3] sm:$0x3]
    %v65 = vsub.f32 %v50, %v55
    %v66 = vmul.f32 %v65, 1.442695
    %v67 = vpow.pop %v66
    %v68 = vmul.f32 %v64, %v67
    %v69 = vsel %vm51, %v63, 0.0
    %70 = vadd.xlane.f32.xlu0 %v69
    %v71 = vpop.xlane.xlu0 %70
    %v72 = vadd.f32 %v68, %v71
    %vm73 = vcmask 1024
    %74 = vst.msk [vmem:[#allocation3] sm:$0x3] %vm73, %v72
    %75 = vst.msk [vmem:[#allocation2] sm:$0x3] %vm73, %v55
    %v76 = vld [vmem:[#allocation9] sm:$0x3]
    %v77 = vld [vmem:[#allocation4] sm:$0x3]
    %v78 = vsel %vm51, %v76, -inf
    %79 = vmax.xlane.f32.xlu0 %v78
    %v80 = vpop.xlane.xlu0 %79
    %v81 = vmax.f32 %v77, %v80
    %83 = vset.pattern.permute.xlu0 0
    %84 = vperm.xlu0 %83, %v81
    %v85 = vpop.permute.xlu0 %84
    %v87 = vsub.f32 %v76, %v85
    %v88 = vmul.f32 %v87, 1.442695
    %v89 = vpow.pop %v88
    %v90 = vld [vmem:[#allocation5] sm:$0x3]
    %v91 = vsub.f32 %v77, %v81
    %v92 = vmul.f32 %v91, 1.442695
    %v93 = vpow.pop %v92
    %v94 = vmul.f32 %v90, %v93
    %v95 = vsel %vm51, %v89, 0.0
    %96 = vadd.xlane.f32.xlu0 %v95
    %v97 = vpop.xlane.xlu0 %96
    %v98 = vadd.f32 %v94, %v97
    %99 = vst.msk [vmem:[#allocation5] sm:$0x3] %vm73, %v98
    %100 = vst.msk [vmem:[#allocation4] sm:$0x3] %vm73, %v81
    // Predicated region
    $region22: #{tpu_custom_call.1} parent=1 // pred_check
      %p101 = pneg %p40
    $region23: #{tpu_custom_call.1} parent=1 // pred_check_branch
      %103 = sbr.rel (%p101) target = $region25
    $region24: #{tpu_custom_call.1} parent=1 // pred_region
      %v104 = vld [vmem:[#allocation2] sm:$0x3]
      %v105 = vld [vmem:[#allocation3] sm:$0x3]
      %v106 = vlog2.pop %v105
      %v107 = vmul.f32 %v106, 0.6931472
      %v108 = vadd.f32 %v104, %v107
      %v109 = vld [vmem:[#allocation4] sm:$0x3]
      %v110 = vld [vmem:[#allocation5] sm:$0x3]
      %v111 = vlog2.pop %v110
      %v112 = vmul.f32 %v111, 0.6931472
      %v113 = vadd.f32 %v109, %v112
      %115 = vrot.lane.b32.xlu0 %v113, 1
      %v116 = vpop.permute.xlu0 %115
      %vm118 = vcmask 7168
      %v119 = vsel %vm118, %v108, %v116
      %vm120 = vcmask 9216
      %121 = vst.msk [vmem:[#allocation11] sm:$0x3] %vm120, %v119
    $region25: #{tpu_custom_call.1} parent=1 // pred_fallthru
      _
    // Predicated region
    $region26: #{tpu_custom_call.1} parent=1 // pred_check
      _
    $region27: #{tpu_custom_call.1} parent=1 // pred_check_branch
      %123 = sbr.rel (0) target = $region29
    $region28: #{tpu_custom_call.1} parent=1 // pred_region
      %125 = vsyncadd [#allocation8], 0
      %s127 = sshll.u32 [#allocation11], 4
      %s128 = int_to_ptr.vmem [resolvable:$true] %s127
      %s129 = sshll.u32 %s2, 4
      %s130 = int_to_ptr.hbm [resolvable:$true] %s129
      %132 = dma.vmem_to_hbm [thread:$0]  %s128, 32, %s130, [#allocation8]
    $region29: #{tpu_custom_call.1} parent=1 // pred_fallthru
      _
    // Predicated region
    $region30: #{tpu_custom_call.1} parent=1 // pred_check
      _
    $region31: #{tpu_custom_call.1} parent=1 // pred_check_branch
      %134 = sbr.rel (0) target = $region33
    $region32: #{tpu_custom_call.1} parent=1 // pred_region
      %136 = dma.done [#allocation8], 32
    $region33: #{tpu_custom_call.1} parent=1 // pred_fallthru
      _
    %137 = vsyncpa [#allocation7], 1
    %138 = vsyncpa [#allocation10], 1
    %139 = vsyncpa [#allocation8], 1

</llo_original>
